<compile_context>
chip_gen: v6e
topology: v6e:2x2x1
jax: 0.10.0
libtpu: 0.0.40
codegen_flags: <defaults>
</compile_context>

<pallas_src>
import numpy as np
import jax
import jax.numpy as jnp
from jax import lax
from jax.experimental import pallas as pl
from jax.experimental.pallas import tpu as pltpu


# v7x-safe per-step VMEM budget for the double-buffered high/low/out blocks
# (v7x: 64 MiB physical / 32 MiB default scoped; v5e/v6e could ~double these).
_VMEM_IO_BUDGET = 18 * 1024 * 1024
_VMEM_LIMIT_BYTES = 28 * 1024 * 1024


def _bilinear_matrix(out_size, in_size):
    """Interpolation matrix == nn.Upsample(mode='bilinear', align_corners=False)."""
    m = np.zeros((out_size, in_size), dtype=np.float32)
    scale = in_size / out_size
    for o in range(out_size):
        src = max((o + 0.5) * scale - 0.5, 0.0)
        i0 = min(int(np.floor(src)), in_size - 1)
        i1 = min(i0 + 1, in_size - 1)
        frac = src - i0
        m[o, i0] += 1.0 - frac
        m[o, i1] += frac
    return m


def _pick_samples_per_block(N, *, rows_high, rows_low, bytes_per_sample,
                            high_sublane=8, min_steps=2,
                            io_budget=_VMEM_IO_BUDGET):
    """Samples per grid step.

    Largest divisor nb of N such that:
      * grid = N // nb has >= min_steps steps (so double-buffering has something
        to overlap with and v7x's two TensorCores both get work), preferring an
        even step count for the megacore split;
      * the high/low/out blocks stay sublane-aligned;
      * 2x (double-buffered) per-step I/O blocks fit the VMEM budget.
    """
    min_steps = min(min_steps, N)
    best = None
    for nb in range(1, N + 1):
        if N % nb:
            continue
        steps = N // nb
        if steps < min_steps:
            continue
        aligned = (nb == N) or (
            (nb * rows_high) % high_sublane == 0 and (nb * rows_low) % 8 == 0)
        if not aligned:
            continue
        if 2 * nb * bytes_per_sample > io_budget:
            continue
        key = (steps % 2 == 0, nb)   # prefer even step counts, then bigger blocks
        if best is None or key > best[0]:
            best = (key, nb)
    return 1 if best is None else best[1]


def _const_spec(shape):
    """BlockSpec for a grid-invariant operand (constant index_map).

    Single-buffered via pipeline_mode=pl.Buffered(1): these operands are never
    re-fetched, so the default second buffer is wasted VMEM.  Falls back to the
    default double-buffering on JAX versions without pipeline_mode support.
    """
    index_map = lambda i: (0,) * len(shape)
    try:
        return pl.BlockSpec(shape, index_map, pipeline_mode=pl.Buffered(1))
    except (TypeError, AttributeError):
        return pl.BlockSpec(shape, index_map)


def _upsample_block_kernel(high_ref, low_ref, wk_ref, b_ref, uwk_ref, uh_ref,
                           out_ref):
    # high_ref: (nb*h, w*Cin)      low_ref / out_ref: (nb*H, W*Cout)
    # wk_ref:   (w*Cin, w*Cout)    b_ref: (1, w*Cout) f32
    # uwk_ref:  (w*Cout, W*Cout)   uh_ref: (H, h)
    H, h = uh_ref.shape
    nb = high_ref.shape[0] // h
    D = out_ref.shape[-1]                 # W * Cout (lane-dense, multiple of 128)
    cdtype = wk_ref.dtype                 # MXU operand dtype (f32 or bf16)

    # 1x1 conv (+ folded BN) as kron(I_w, W_eff^T); bias add + ReLU in f32 (VPU).
    x = high_ref[...]
    y = jnp.dot(x, wk_ref[...], preferred_element_type=jnp.float32) + b_ref[...]
    y = jnp.maximum(y, 0.0)                                        # (nb*h, w*Cout) f32

    # Bilinear x2 upsample: width first (fewer MXU MACs), then rows.  Rows are
    # done as a batched contraction with the plain (H, h) matrix — no
    # kron(I_nb, uh) block-diagonal constant.
    r = jnp.dot(y.astype(cdtype), uwk_ref[...],
                preferred_element_type=jnp.float32)                # (nb*h, W*Cout)
    r = r.astype(cdtype)
    if nb == 1:
        up = jnp.dot(uh_ref[...], r, preferred_element_type=jnp.float32)
    else:
        r3 = r.reshape(nb, h, D)
        uh_b = jnp.broadcast_to(uh_ref[...][None], (nb, H, h))
        up = lax.dot_general(uh_b, r3,
                             dimension_numbers=(((2,), (1,)), ((0,), (0,))),
                             preferred_element_type=jnp.float32)   # (nb, H, W*Cout)
        up = up.reshape(nb * H, D)

    # Residual add + ReLU kept in f32 (v5e has no bf16 VPU path).
    out_ref[...] = jnp.maximum(up + low_ref[...], 0.0).astype(out_ref.dtype)


def prepare_upsample_params(conv_w, gamma, beta, run_mean, run_var, *, h, w,
                            upscale=2, eps=1e-5, matmul_dtype=jnp.float32):
    """One-time (per layer) constants: BN fold + conv/upsample matrices.

    `matmul_dtype` sets the MXU operand dtype for the conv weights and the
    bilinear matrices (and for `high`, cast in the wrapper).  Accumulation and
    the bias/residual path always stay f32.
    """
    Cout = conv_w.shape[0]
    H, W = h * upscale, w * upscale
    md = jnp.dtype(matmul_dtype)

    inv_std = 1.0 / jnp.sqrt(run_var + eps)
    w_eff = conv_w * (gamma * inv_std)[:, None]                     # (Cout, Cin)
    b_eff = beta - run_mean * gamma * inv_std                       # (Cout,)

    # Conv as kron(I_w, W_eff^T): keeps lanes dense at these tiny channel counts.
    wk = jnp.kron(jnp.eye(w, dtype=jnp.float32), w_eff.T.astype(jnp.float32))
    b_tiled = jnp.tile(b_eff.astype(jnp.float32), w)[None, :]       # (1, w*Cout) f32

    uw = _bilinear_matrix(W, w)                                     # (W, w)
    uwk = np.kron(uw.T, np.eye(Cout, dtype=np.float32))             # (w*Cout, W*Cout)
    uh = _bilinear_matrix(H, h)                                     # (H, h)
    # 0 / 0.25 / 0.75 / 1.0 are exact in bf16 -> upsample matrices lose nothing.
    return {"wk": wk.astype(md), "b": b_tiled,
            "uwk": jnp.asarray(uwk, dtype=md), "uh": jnp.asarray(uh, dtype=md)}


@jax.jit
def upsample_block(low, high, params):
    """low: (N, Cout, H, W), high: (N, Cin, h, w); params from prepare_upsample_params."""
    N, Cin, h, w = high.shape
    Nl, Cout, H, W = low.shape
    wk, b_tiled, uwk, uh = params["wk"], params["b"], params["uwk"], params["uh"]
    assert Nl == N and uh.shape == (H, h)
    assert wk.shape == (w * Cin, w * Cout) and uwk.shape == (w * Cout, W * Cout)

    cdtype = wk.dtype
    high = high.astype(cdtype)   # cast before the transpose: half the glue traffic in bf16 mode

    # Byte-aware block sizing; keeps >= 2 grid steps for pipelining / v7x megacore.
    bytes_per_sample = (h * w * Cin * cdtype.itemsize
                        + 2 * H * W * Cout * low.dtype.itemsize)    # high + low + out
    nb = _pick_samples_per_block(
        N, rows_high=h, rows_low=H, bytes_per_sample=bytes_per_sample,
        high_sublane=16 if cdtype == jnp.bfloat16 else 8)
    grid = (N // nb,)

    # NCHW -> flattened channels-last rows (layout glue only; a channels-last
    # surrounding model would make these transposes disappear).
    high_flat = jnp.transpose(high, (0, 2, 3, 1)).reshape(N * h, w * Cin)
    low_flat = jnp.transpose(low, (0, 2, 3, 1)).reshape(N * H, W * Cout)

    flops = 2 * N * h * (w * Cin) * (w * Cout)        # conv (kron form)
    flops += 2 * N * h * (w * Cout) * (W * Cout)      # width upsample
    flops += 2 * N * H * h * (W * Cout)               # row upsample
    bytes_accessed = (high_flat.size * high_flat.dtype.itemsize
                      + 2 * low_flat.size * low_flat.dtype.itemsize  # low in + out
                      + wk.size * wk.dtype.itemsize
                      + b_tiled.size * b_tiled.dtype.itemsize
                      + uwk.size * uwk.dtype.itemsize
                      + uh.size * uh.dtype.itemsize)

    out_flat = pl.pallas_call(
        _upsample_block_kernel,
        out_shape=jax.ShapeDtypeStruct((N * H, W * Cout), low.dtype),
        grid_spec=pltpu.PrefetchScalarGridSpec(
            num_scalar_prefetch=0,
            grid=grid,
            in_specs=[
                pl.BlockSpec((nb * h, w * Cin), lambda i: (i, 0)),    # high rows
                pl.BlockSpec((nb * H, W * Cout), lambda i: (i, 0)),   # low rows (residual)
                _const_spec((w * Cin, w * Cout)),                     # folded conv weights
                _const_spec((1, w * Cout)),                           # folded conv bias
                _const_spec((w * Cout, W * Cout)),                    # width upsample matrix
                _const_spec((H, h)),                                  # row upsample matrix
            ],
            out_specs=pl.BlockSpec((nb * H, W * Cout), lambda i: (i, 0)),
        ),
        compiler_params=pltpu.CompilerParams(
            dimension_semantics=("parallel",),
            vmem_limit_bytes=_VMEM_LIMIT_BYTES),
        cost_estimate=pl.CostEstimate(flops=flops, transcendentals=0,
                                      bytes_accessed=bytes_accessed),
        input_output_aliases={1: 0},   # reuse the `low` slab for the output
    )(high_flat, low_flat, wk, b_tiled, uwk, uh)

    return jnp.transpose(out_flat.reshape(N, H, W, Cout), (0, 3, 1, 2))


def _reference(low, high, conv_w, gamma, beta, run_mean, run_var, eps=1e-5):
    """Pure-JAX reference (conv via einsum, upsample via jax.image.resize)."""
    inv_std = 1.0 / jnp.sqrt(run_var + eps)
    y = jnp.einsum('oc,nchw->nohw', conv_w, high)
    y = (y - run_mean[None, :, None, None]) * (gamma * inv_std)[None, :, None, None] \
        + beta[None, :, None, None]
    y = jnp.maximum(y, 0.0)
    N, C, h, w = y.shape
    up = jax.image.resize(y, (N, C, 2 * h, 2 * w), method='bilinear')
    return jnp.maximum(up + low, 0.0)


if __name__ == "__main__":
    # Small shapes consistent with the module: low_channel=8, high_channel=16,
    # x2 upsample.  N=4 gives 2 grid steps with 2 samples per block, exercising
    # both the multi-step pipeline and the batched row-upsample path.
    N, Cin, Cout, h, w = 4, 16, 8, 8, 8
    H, W = 2 * h, 2 * w

    key = jax.random.PRNGKey(0)
    k1, k2, k3, k4, k5, k6, k7 = jax.random.split(key, 7)
    high = jax.random.normal(k1, (N, Cin, h, w), jnp.float32)
    low = jax.random.normal(k2, (N, Cout, H, W), jnp.float32)
    conv_w = 0.1 * jax.random.normal(k3, (Cout, Cin), jnp.float32)   # Conv2d(Cin,Cout,1), bias=False
    gamma = jax.random.uniform(k4, (Cout,), jnp.float32, 0.8, 1.2)   # BatchNorm2d (eval) params/stats
    beta = 0.1 * jax.random.normal(k5, (Cout,), jnp.float32)
    run_mean = 0.1 * jax.random.normal(k6, (Cout,), jnp.float32)
    run_var = jax.random.uniform(k7, (Cout,), jnp.float32, 0.5, 1.5)

    ref = jax.block_until_ready(
        _reference(low, high, conv_w, gamma, beta, run_mean, run_var))

    # --- f32 MXU operands: tight absolute tolerance vs. the module semantics ---
    params_f32 = prepare_upsample_params(conv_w, gamma, beta, run_mean, run_var,
                                         h=h, w=w, matmul_dtype=jnp.float32)
    out = jax.block_until_ready(upsample_block(low, high, params_f32))
    assert out.shape == (N, Cout, H, W)
    err_f32 = float(jnp.max(jnp.abs(out - ref)))
    if err_f32 > 1e-3:
        raise AssertionError(f"f32 kernel mismatch vs reference, max abs err = {err_f32}")

    # --- bf16 MXU operands (perf-review option): halves HBM/VMEM for `high` and
    # the constants; accumulation + bias/residual/ReLU stay f32.  bf16 operand
    # rounding is ~2^-9 relative, i.e. a few e-3 absolute at these O(0.3)
    # magnitudes, hence the correspondingly looser check. ---
    params_bf16 = prepare_upsample_params(conv_w, gamma, beta, run_mean, run_var,
                                          h=h, w=w, matmul_dtype=jnp.bfloat16)
    out_bf16 = jax.block_until_ready(upsample_block(low, high, params_bf16))
    err_bf16 = float(jnp.max(jnp.abs(out_bf16 - ref)))
    if err_bf16 > 1e-2:
        raise AssertionError(f"bf16 kernel mismatch vs reference, max abs err = {err_bf16}")

    print("KERNEL_OK")
</pallas_src>

<mosaic_0001>
module attributes {stable_mosaic.version = 11 : i64} {
  func.func @_upsample_block_kernel(%arg0: i32, %arg1: memref<16x128xf32, #tpu.memory_space<vmem>>, %arg2: memref<32x128xf32, #tpu.memory_space<vmem>>, %arg3: memref<128x64xf32, #tpu.memory_space<vmem>>, %arg4: memref<1x64xf32, #tpu.memory_space<vmem>>, %arg5: memref<64x128xf32, #tpu.memory_space<vmem>>, %arg6: memref<16x8xf32, #tpu.memory_space<vmem>>, %arg7: memref<32x128xf32, #tpu.memory_space<vmem>>) attributes {dimension_semantics = [#tpu.dimension_semantics<parallel>], iteration_bounds = array<i64: 2>, scalar_prefetch = 0 : i64, scratch_operands = 0 : i64, tpu.core_type = #tpu.core_type<tc>, window_params = [{transform_indices = @transform_0, window_bounds = array<i64: 16, 128>}, {transform_indices = @transform_1, window_bounds = array<i64: 32, 128>}, {pipeline_mode = #tpu.pipeline_mode<synchronous>, transform_indices = @transform_2, window_bounds = array<i64: 128, 64>}, {pipeline_mode = #tpu.pipeline_mode<synchronous>, transform_indices = @transform_3, window_bounds = array<i64: 1, 64>}, {pipeline_mode = #tpu.pipeline_mode<synchronous>, transform_indices = @transform_4, window_bounds = array<i64: 64, 128>}, {pipeline_mode = #tpu.pipeline_mode<synchronous>, transform_indices = @transform_5, window_bounds = array<i64: 16, 8>}, {transform_indices = @transform_6, window_bounds = array<i64: 32, 128>}]} {
    %c0 = arith.constant 0 : index
    %c0_0 = arith.constant 0 : index
    %0 = vector.load %arg1[%c0, %c0_0] : memref<16x128xf32, #tpu.memory_space<vmem>>, vector<16x128xf32>
    %c0_1 = arith.constant 0 : index
    %c0_2 = arith.constant 0 : index
    %1 = vector.load %arg3[%c0_1, %c0_2] : memref<128x64xf32, #tpu.memory_space<vmem>>, vector<128x64xf32>
    %cst = arith.constant dense<0.000000e+00> : vector<16x64xf32>
    %2 = tpu.matmul %0, %1, %cst {dimension_numbers = #tpu.dot_dimension_numbers<[1], [0], [0], [1], [0, 0, 1, 1], [], []>} : vector<16x128xf32>, vector<128x64xf32>, vector<16x64xf32> -> vector<16x64xf32>
    %c0_3 = arith.constant 0 : index
    %c0_4 = arith.constant 0 : index
    %3 = vector.load %arg4[%c0_3, %c0_4] : memref<1x64xf32, #tpu.memory_space<vmem>>, vector<1x64xf32>
    %4 = vector.broadcast %3 : vector<1x64xf32> to vector<16x64xf32>
    %5 = arith.addf %2, %4 : vector<16x64xf32>
    %cst_5 = arith.constant 0.000000e+00 : f32
    %6 = vector.broadcast %cst_5 : f32 to vector<16x64xf32>
    %7 = arith.maximumf %5, %6 : vector<16x64xf32>
    %c0_6 = arith.constant 0 : index
    %c0_7 = arith.constant 0 : index
    %8 = vector.load %arg5[%c0_6, %c0_7] : memref<64x128xf32, #tpu.memory_space<vmem>>, vector<64x128xf32>
    %cst_8 = arith.constant dense<0.000000e+00> : vector<16x128xf32>
    %9 = tpu.matmul %7, %8, %cst_8 {dimension_numbers = #tpu.dot_dimension_numbers<[1], [0], [0], [1], [0, 0, 1, 1], [], []>} : vector<16x64xf32>, vector<64x128xf32>, vector<16x128xf32> -> vector<16x128xf32>
    %10 = vector.shape_cast %9 : vector<16x128xf32> to vector<2x8x128xf32>
    %c0_9 = arith.constant 0 : index
    %c0_10 = arith.constant 0 : index
    %11 = vector.load %arg6[%c0_9, %c0_10] : memref<16x8xf32, #tpu.memory_space<vmem>>, vector<16x8xf32>
    %12 = vector.shape_cast %11 : vector<16x8xf32> to vector<1x16x8xf32>
    %13 = vector.shape_cast %12 : vector<1x16x8xf32> to vector<1x16x8xf32>
    %14 = vector.broadcast %13 : vector<1x16x8xf32> to vector<2x16x8xf32>
    %cst_11 = arith.constant dense<0.000000e+00> : vector<2x16x128xf32>
    %15 = tpu.matmul %14, %10, %cst_11 {dimension_numbers = #tpu.dot_dimension_numbers<[2], [1], [1], [2], [0, 0, 0, 1, 1, 2], [0], [0]>} : vector<2x16x8xf32>, vector<2x8x128xf32>, vector<2x16x128xf32> -> vector<2x16x128xf32>
    %16 = vector.shape_cast %15 : vector<2x16x128xf32> to vector<32x128xf32>
    %c0_12 = arith.constant 0 : index
    %c0_13 = arith.constant 0 : index
    %17 = vector.load %arg2[%c0_12, %c0_13] : memref<32x128xf32, #tpu.memory_space<vmem>>, vector<32x128xf32>
    %18 = arith.addf %16, %17 : vector<32x128xf32>
    %cst_14 = arith.constant 0.000000e+00 : f32
    %19 = vector.broadcast %cst_14 : f32 to vector<32x128xf32>
    %20 = arith.maximumf %18, %19 : vector<32x128xf32>
    %c0_15 = arith.constant 0 : index
    %c0_16 = arith.constant 0 : index
    %21 = vector.load %arg7[%c0_15, %c0_16] : memref<32x128xf32, #tpu.memory_space<vmem>>, vector<32x128xf32>
    tpu.vector_store %arg7[%c0_15, %c0_16], %20 {strides = array<i32>} : memref<32x128xf32, #tpu.memory_space<vmem>>, vector<32x128xf32>,
    return
  }
  func.func @transform_0(%arg0: i32) -> (i32, i32) {
    %c0_i32 = arith.constant 0 : i32
    %c0_i32_0 = arith.constant 0 : i32
    return %arg0, %c0_i32 : i32, i32
  }
  func.func @transform_1(%arg0: i32) -> (i32, i32) {
    %c0_i32 = arith.constant 0 : i32
    %c0_i32_0 = arith.constant 0 : i32
    return %arg0, %c0_i32 : i32, i32
  }
  func.func @transform_2(%arg0: i32) -> (i32, i32) {
    %c0_i32 = arith.constant 0 : i32
    %c0_i32_0 = arith.constant 0 : i32
    %c0_i32_1 = arith.constant 0 : i32
    return %c0_i32, %c0_i32_0 : i32, i32
  }
  func.func @transform_3(%arg0: i32) -> (i32, i32) {
    %c0_i32 = arith.constant 0 : i32
    %c0_i32_0 = arith.constant 0 : i32
    %c0_i32_1 = arith.constant 0 : i32
    return %c0_i32, %c0_i32_0 : i32, i32
  }
  func.func @transform_4(%arg0: i32) -> (i32, i32) {
    %c0_i32 = arith.constant 0 : i32
    %c0_i32_0 = arith.constant 0 : i32
    %c0_i32_1 = arith.constant 0 : i32
    return %c0_i32, %c0_i32_0 : i32, i32
  }
  func.func @transform_5(%arg0: i32) -> (i32, i32) {
    %c0_i32 = arith.constant 0 : i32
    %c0_i32_0 = arith.constant 0 : i32
    %c0_i32_1 = arith.constant 0 : i32
    return %c0_i32, %c0_i32_0 : i32, i32
  }
  func.func @transform_6(%arg0: i32) -> (i32, i32) {
    %c0_i32 = arith.constant 0 : i32
    %c0_i32_0 = arith.constant 0 : i32
    return %arg0, %c0_i32 : i32, i32
  }
}

</mosaic_0001>

<llo_original>
// kernel: upsample_block.1
$region0: #{upsample_block.1}
  #allocation0 [shape = 'u32[]', space=smem, size = 0x4, offset = 0x4, fixed_abs, tag = 'smem constant byte address 0x4 - core index']
  #allocation1 [shape = 'u32[144,128]{1,0:T(1,128)}', space=vmem, size = 0x12000, scoped, tag = 'internal scratch']
  %s0 = inlined_call_operand.vmem [shape: f32[32,128], index: 0, kind: input, shape index: {}]
  %s1 = inlined_call_operand.vmem [shape: f32[64,128], index: 1, kind: input, shape index: {}, may-alias: {1,6}]
  %s2 = inlined_call_operand.vmem [shape: f32[128,64], index: 2, kind: input, shape index: {}]
  %s3 = inlined_call_operand.vmem [shape: f32[1,64], index: 3, kind: input, shape index: {}]
  %s4 = inlined_call_operand.vmem [shape: f32[64,128], index: 4, kind: input, shape index: {}]
  %s5 = inlined_call_operand.vmem [shape: f32[16,8], index: 5, kind: input, shape index: {}]
  %s6 = inlined_call_operand.vmem [shape: f32[64,128], index: 6, kind: output, shape index: {}, may-alias: {1,6}]
  %s7 = sld [smem:[#allocation0]]
  $region57: #{upsample_block.1} parent=0
    _
  %s9 = ssub.s32 1, %s7
  %s10 = scalar_select 0, %s9, %s7
  loop: start=0, step=1, limit=4
  $region2: #{upsample_block.1} parent=0 // loop_pre_header
    _
  $region3: #{upsample_block.1} parent=0 // loop_header
    %s12 = sphi 0, %s16
    %p13 = scmp.ge.s32.totalorder %s12, 4
    %s22 = sphi 0, %s24
    %s25 = sphi 0, %s22
    %s26 = sphi 0, %s25
    %s42 = sphi 0, %s26
    %s48 = sphi 0, %s50
    %s51 = sphi 0, %s48
    %s52 = sphi 0, %s51
    %s68 = sphi 0, %s52
    %s72 = sphi 0, %s72
    %s74 = sphi 0, %s72
    %s75 = sphi 0, %s74
    %s89 = sphi 0, %s75
    %s93 = sphi 0, %s93
    %s95 = sphi 0, %s93
    %s96 = sphi 0, %s95
    %s110 = sphi 0, %s96
    %s114 = sphi 0, %s114
    %s116 = sphi 0, %s114
    %s117 = sphi 0, %s116
    %s131 = sphi 0, %s117
    %s135 = sphi 0, %s135
    %s137 = sphi 0, %s135
    %s138 = sphi 0, %s137
    %s152 = sphi 0, %s138
    %s158 = sphi 0, %s160
    %s161 = sphi 0, %s158
    %s162 = sphi 0, %s161
    %s178 = sphi 0, %s162
  $region4: #{upsample_block.1} parent=0 // loop_header_branch
    %15 = sbr.rel (%p13) target = $region8
  $region5: #{upsample_block.1} parent=0 // loop_body
    %s17 = ssub.s32 %s12, 1
    %s18 = ssub.s32 %s12, 2
    %s19 = sadd.s32 %s12, 1
    %s20 = ssub.s32 %s12, %s19
    %p21 = scmp.eq.s32.totalorder %s20, 0
    %s23 = sadd.s32 %s22, 1
    %s24 = scalar_select %p21, %s22, %s23
    %p27 = pneg %p21
    %p28 = scmp.eq.s32.totalorder %s12, 1
    %p29 = por %p27, %p28
    %p30 = scmp.ne.s32.totalorder %s22, %s25
    %p31 = scmp.eq.s32.totalorder %s12, 0
    %p32 = por %p30, %p31
    %p33 = scmp.ne.s32.totalorder %s22, %s25
    %p34 = scmp.eq.s32.totalorder %s17, 1
    %p35 = por %p33, %p34
    %p36 = scmp.ne.s32.totalorder %s25, %s26
    %p37 = scmp.eq.s32.totalorder %s17, 0
    %p38 = por %p36, %p37
    %p39 = scmp.ne.s32.totalorder %s25, %s26
    %p40 = scmp.eq.s32.totalorder %s18, 1
    %p41 = por %p39, %p40
    %p43 = scmp.ne.s32.totalorder %s26, %s42
    %p44 = scmp.eq.s32.totalorder %s18, 0
    %p45 = por %p43, %p44
    %s46 = ssub.s32 %s12, %s19
    %p47 = scmp.eq.s32.totalorder %s46, 0
    %s49 = sadd.s32 %s48, 1
    %s50 = scalar_select %p47, %s48, %s49
    %p53 = pneg %p47
    %p54 = scmp.eq.s32.totalorder %s12, 1
    %p55 = por %p53, %p54
    %p56 = scmp.ne.s32.totalorder %s48, %s51
    %p57 = scmp.eq.s32.totalorder %s12, 0
    %p58 = por %p56, %p57
    %p59 = scmp.ne.s32.totalorder %s48, %s51
    %p60 = scmp.eq.s32.totalorder %s17, 1
    %p61 = por %p59, %p60
    %p62 = scmp.ne.s32.totalorder %s51, %s52
    %p63 = scmp.eq.s32.totalorder %s17, 0
    %p64 = por %p62, %p63
    %p65 = scmp.ne.s32.totalorder %s51, %s52
    %p66 = scmp.eq.s32.totalorder %s18, 1
    %p67 = por %p65, %p66
    %p69 = scmp.ne.s32.totalorder %s52, %s68
    %p70 = scmp.eq.s32.totalorder %s18, 0
    %p71 = por %p69, %p70
    %s73 = sadd.s32 %s72, 1
    %p76 = scmp.eq.s32.totalorder %s12, 1
    %p77 = scmp.ne.s32.totalorder %s72, %s74
    %p78 = scmp.eq.s32.totalorder %s12, 0
    %p79 = por %p77, %p78
    %p80 = scmp.ne.s32.totalorder %s72, %s74
    %p81 = scmp.eq.s32.totalorder %s17, 1
    %p82 = por %p80, %p81
    %p83 = scmp.ne.s32.totalorder %s74, %s75
    %p84 = scmp.eq.s32.totalorder %s17, 0
    %p85 = por %p83, %p84
    %p86 = scmp.ne.s32.totalorder %s74, %s75
    %p87 = scmp.eq.s32.totalorder %s18, 1
    %p88 = por %p86, %p87
    %p90 = scmp.ne.s32.totalorder %s75, %s89
    %p91 = scmp.eq.s32.totalorder %s18, 0
    %p92 = por %p90, %p91
    %s94 = sadd.s32 %s93, 1
    %p97 = scmp.eq.s32.totalorder %s12, 1
    %p98 = scmp.ne.s32.totalorder %s93, %s95
    %p99 = scmp.eq.s32.totalorder %s12, 0
    %p100 = por %p98, %p99
    %p101 = scmp.ne.s32.totalorder %s93, %s95
    %p102 = scmp.eq.s32.totalorder %s17, 1
    %p103 = por %p101, %p102
    %p104 = scmp.ne.s32.totalorder %s95, %s96
    %p105 = scmp.eq.s32.totalorder %s17, 0
    %p106 = por %p104, %p105
    %p107 = scmp.ne.s32.totalorder %s95, %s96
    %p108 = scmp.eq.s32.totalorder %s18, 1
    %p109 = por %p107, %p108
    %p111 = scmp.ne.s32.totalorder %s96, %s110
    %p112 = scmp.eq.s32.totalorder %s18, 0
    %p113 = por %p111, %p112
    %s115 = sadd.s32 %s114, 1
    %p118 = scmp.eq.s32.totalorder %s12, 1
    %p119 = scmp.ne.s32.totalorder %s114, %s116
    %p120 = scmp.eq.s32.totalorder %s12, 0
    %p121 = por %p119, %p120
    %p122 = scmp.ne.s32.totalorder %s114, %s116
    %p123 = scmp.eq.s32.totalorder %s17, 1
    %p124 = por %p122, %p123
    %p125 = scmp.ne.s32.totalorder %s116, %s117
    %p126 = scmp.eq.s32.totalorder %s17, 0
    %p127 = por %p125, %p126
    %p128 = scmp.ne.s32.totalorder %s116, %s117
    %p129 = scmp.eq.s32.totalorder %s18, 1
    %p130 = por %p128, %p129
    %p132 = scmp.ne.s32.totalorder %s117, %s131
    %p133 = scmp.eq.s32.totalorder %s18, 0
    %p134 = por %p132, %p133
    %s136 = sadd.s32 %s135, 1
    %p139 = scmp.eq.s32.totalorder %s12, 1
    %p140 = scmp.ne.s32.totalorder %s135, %s137
    %p141 = scmp.eq.s32.totalorder %s12, 0
    %p142 = por %p140, %p141
    %p143 = scmp.ne.s32.totalorder %s135, %s137
    %p144 = scmp.eq.s32.totalorder %s17, 1
    %p145 = por %p143, %p144
    %p146 = scmp.ne.s32.totalorder %s137, %s138
    %p147 = scmp.eq.s32.totalorder %s17, 0
    %p148 = por %p146, %p147
    %p149 = scmp.ne.s32.totalorder %s137, %s138
    %p150 = scmp.eq.s32.totalorder %s18, 1
    %p151 = por %p149, %p150
    %p153 = scmp.ne.s32.totalorder %s138, %s152
    %p154 = scmp.eq.s32.totalorder %s18, 0
    %p155 = por %p153, %p154
    %s156 = ssub.s32 %s12, %s19
    %p157 = scmp.eq.s32.totalorder %s156, 0
    %s159 = sadd.s32 %s158, 1
    %s160 = scalar_select %p157, %s158, %s159
    %p163 = pneg %p157
    %p164 = scmp.eq.s32.totalorder %s12, 1
    %p165 = por %p163, %p164
    %p166 = scmp.ne.s32.totalorder %s158, %s161
    %p167 = scmp.eq.s32.totalorder %s12, 0
    %p168 = por %p166, %p167
    %p169 = scmp.ne.s32.totalorder %s158, %s161
    %p170 = scmp.eq.s32.totalorder %s17, 1
    %p171 = por %p169, %p170
    %p172 = scmp.ne.s32.totalorder %s161, %s162
    %p173 = scmp.eq.s32.totalorder %s17, 0
    %p174 = por %p172, %p173
    %p175 = scmp.ne.s32.totalorder %s161, %s162
    %p176 = scmp.eq.s32.totalorder %s18, 1
    %p177 = por %p175, %p176
    %p179 = scmp.ne.s32.totalorder %s162, %s178
    %p180 = scmp.eq.s32.totalorder %s18, 0
    %p181 = por %p179, %p180
    %p182 = scmp.le.s32.totalorder 1, %s12
    %p183 = scmp.lt.s32.totalorder %s12, 3
    %p184 = pnand %p182, %p183
    %p185 = pneg %p184
    // Predicated region
    $region9: #{upsample_block.1} parent=5 // pred_check
      _
    $region10: #{upsample_block.1} parent=5 // pred_check_branch
      %187 = sbr.rel (%p184) target = $region12
    $region11: #{upsample_block.1} parent=5 // pred_region
      %s188 = ssub.s32 %s12, 1
      // Predicated region
      $region13: #{upsample_block.1} parent=11 // pred_check
        %p189 = pneg %p85
      $region14: #{upsample_block.1} parent=11 // pred_check_branch
        %191 = sbr.rel (%p189) target = $region16
      $region15: #{upsample_block.1} parent=11 // pred_region
        _
      $region16: #{upsample_block.1} parent=11 // pred_fallthru
        _
      // Predicated region
      $region17: #{upsample_block.1} parent=11 // pred_check
        %p192 = pneg %p106
      $region18: #{upsample_block.1} parent=11 // pred_check_branch
        %194 = sbr.rel (%p192) target = $region20
      $region19: #{upsample_block.1} parent=11 // pred_region
        _
      $region20: #{upsample_block.1} parent=11 // pred_fallthru
        _
      // Predicated region
      $region21: #{upsample_block.1} parent=11 // pred_check
        %p195 = pneg %p127
      $region22: #{upsample_block.1} parent=11 // pred_check_branch
        %197 = sbr.rel (%p195) target = $region24
      $region23: #{upsample_block.1} parent=11 // pred_region
        _
      $region24: #{upsample_block.1} parent=11 // pred_fallthru
        _
      // Predicated region
      $region25: #{upsample_block.1} parent=11 // pred_check
        %p198 = pneg %p148
      $region26: #{upsample_block.1} parent=11 // pred_check_branch
        %200 = sbr.rel (%p198) target = $region28
      $region27: #{upsample_block.1} parent=11 // pred_region
        _
      $region28: #{upsample_block.1} parent=11 // pred_fallthru
        _
    $region12: #{upsample_block.1} parent=5 // pred_fallthru
      _
    %p201 = scmp.lt.s32.totalorder %s12, 2
    // Predicated region
    $region29: #{upsample_block.1} parent=5 // pred_check
      %p202 = pneg %p201
    $region30: #{upsample_block.1} parent=5 // pred_check_branch
      %204 = sbr.rel (%p202) target = $region32
    $region31: #{upsample_block.1} parent=5 // pred_region
      // Predicated region
      $region33: #{upsample_block.1} parent=31 // pred_check
        %p205 = pneg %p32
      $region34: #{upsample_block.1} parent=31 // pred_check_branch
        %207 = sbr.rel (%p205) target = $region36
      $region35: #{upsample_block.1} parent=31 // pred_region
        %s208 = smul.u32 2, %s12
        %p209 = scmp.lt.s32.totalorder %s208, 3
        %s210 = scalar_select %p209, %s208, 3
        %s211 = smul.addr %s210, 8
        %s212 = scalar_lea.vmem %s0, %s211
        %s213 = smul.u32 2, %s12
      $region36: #{upsample_block.1} parent=31 // pred_fallthru
        _
      // Predicated region
      $region37: #{upsample_block.1} parent=31 // pred_check
        %p214 = pneg %p58
      $region38: #{upsample_block.1} parent=31 // pred_check_branch
        %216 = sbr.rel (%p214) target = $region40
      $region39: #{upsample_block.1} parent=31 // pred_region
        %s217 = smul.u32 4, %s12
        %p218 = scmp.lt.s32.totalorder %s217, 7
        %s219 = scalar_select %p218, %s217, 7
        %s220 = smul.addr %s219, 8
        %s221 = scalar_lea.vmem %s1, %s220
        %s222 = smul.u32 4, %s12
      $region40: #{upsample_block.1} parent=31 // pred_fallthru
        _
    $region32: #{upsample_block.1} parent=5 // pred_fallthru
      _
    %p223 = scmp.le.s32.totalorder 1, %s12
    %p224 = scmp.lt.s32.totalorder %s12, 3
    %p225 = pnand %p223, %p224
    %p226 = pneg %p225
    // Predicated region
    $region41: #{upsample_block.1} parent=5 // pred_check
      _
    $region42: #{upsample_block.1} parent=5 // pred_check_branch
      %228 = sbr.rel (%p225) target = $region44
    $region43: #{upsample_block.1} parent=5 // pred_region
      %s229 = ssub.s32 %s12, 1
      %s230 = smul.u32 2, %s17
      %p231 = scmp.lt.s32.totalorder %s230, 3
      %s232 = scalar_select %p231, %s230, 3
      %s233 = smul.addr %s232, 8
      %s234 = scalar_lea.vmem %s0, %s233
      %p235 = pneg %p38
      %p236 = pneg %p35
      %s237 = smul.u32 4, %s17
      %p238 = scmp.lt.s32.totalorder %s237, 7
      %s239 = scalar_select %p238, %s237, 7
      %s240 = smul.addr %s239, 8
      %s241 = scalar_lea.vmem %s1, %s240
      %p242 = pneg %p64
      %p243 = pneg %p61
      %p244 = pneg %p85
      %p245 = pneg %p82
      %p246 = pneg %p106
      %p247 = pneg %p103
      %p248 = pneg %p127
      %p249 = pneg %p124
      %p250 = pneg %p148
      %p251 = pneg %p145
      %p252 = pneg %p174
      %p253 = pneg %p171
      %s254 = smul.u32 4, %s17
      %p255 = scmp.lt.s32.totalorder %s254, 7
      %s256 = scalar_select %p255, %s254, 7
      %s257 = smul.addr %s256, 8
      %s258 = scalar_lea.vmem %s6, %s257
      %s259 = smul.u32 2, %s17
      %p260 = scmp.lt.s32.totalorder %s259, 3
      %s261 = scalar_select %p260, %s259, 3
      %s262 = smul.addr %s261, 8
      %s263 = scalar_lea.vmem %s0, %s262
      %s264 = smul.u32 2, %s17
      %s265 = smul.u32 4, %s17
      %p266 = scmp.lt.s32.totalorder %s265, 7
      %s267 = scalar_select %p266, %s265, 7
      %s268 = smul.addr %s267, 8
      %s269 = scalar_lea.vmem %s1, %s268
      %s270 = smul.u32 4, %s17
      %s271 = smul.u32 4, %s17
      %p272 = scmp.lt.s32.totalorder %s271, 7
      %s273 = scalar_select %p272, %s271, 7
      %s274 = smul.addr %s273, 8
      %s275 = scalar_lea.vmem %s6, %s274
      %s276 = smul.u32 4, %s17
      %v277 = vld [vmem:[%s263] sm:$0xff]
      %v278 = vld [vmem:[%s263 + $0x8] sm:$0xff]
      %v279 = vld [vmem:[%s2] sm:$0xff]
      %v280 = vld [vmem:[%s2 + $0x8] sm:$0xff]
      %v281 = vld [vmem:[%s2 + $0x10] sm:$0xff]
      %v282 = vld [vmem:[%s2 + $0x18] sm:$0xff]
      %v283 = vld [vmem:[%s2 + $0x20] sm:$0xff]
      %v284 = vld [vmem:[%s2 + $0x28] sm:$0xff]
      %v285 = vld [vmem:[%s2 + $0x30] sm:$0xff]
      %v286 = vld [vmem:[%s2 + $0x38] sm:$0xff]
      %v287 = vld [vmem:[%s2 + $0x40] sm:$0xff]
      %v288 = vld [vmem:[%s2 + $0x48] sm:$0xff]
      %v289 = vld [vmem:[%s2 + $0x50] sm:$0xff]
      %v290 = vld [vmem:[%s2 + $0x58] sm:$0xff]
      %v291 = vld [vmem:[%s2 + $0x60] sm:$0xff]
      %v292 = vld [vmem:[%s2 + $0x68] sm:$0xff]
      %v293 = vld [vmem:[%s2 + $0x70] sm:$0xff]
      %v294 = vld [vmem:[%s2 + $0x78] sm:$0xff]
      %v295 = vld [vmem:[%s3] sm:$0x1]
      %v297 = vlaneseq
      %v298 = vshrl.u32 %v297, 7
      %v299 = vsub.s32 0, %v298
      %v300 = vrot.slane %v295, %v299
      %302 = vmatprep.subr.mxu0 0.0
      %303 = vmatpush1.msra.mxu0 %v294
      %304 = vmatprep.subr.mxu0 0.0
      %305 = vmatpush1.msra.mxu0 %v293
      %306 = vmatprep.subr.mxu0 0.0
      %307 = vmatpush1.msra.mxu0 %v292
      %308 = vmatprep.subr.mxu0 0.0
      %309 = vmatpush1.msra.mxu0 %v291
      %310 = vmatprep.subr.mxu0 0.0
      %311 = vmatpush1.msra.mxu0 %v290
      %312 = vmatprep.subr.mxu0 0.0
      %313 = vmatpush1.msra.mxu0 %v289
      %314 = vmatprep.subr.mxu0 0.0
      %315 = vmatpush1.msra.mxu0 %v288
      %316 = vmatprep.subr.mxu0 0.0
      %317 = vmatpush1.msra.mxu0 %v287
      %318 = vmatprep.subr.mxu0 0.0
      %319 = vmatpush1.msra.mxu0 %v286
      %320 = vmatprep.subr.mxu0 0.0
      %321 = vmatpush1.msra.mxu0 %v285
      %322 = vmatprep.subr.mxu0 0.0
      %323 = vmatpush1.msra.mxu0 %v284
      %324 = vmatprep.subr.mxu0 0.0
      %325 = vmatpush1.msra.mxu0 %v283
      %326 = vmatprep.subr.mxu0 0.0
      %327 = vmatpush1.msra.mxu0 %v282
      %328 = vmatprep.subr.mxu0 0.0
      %329 = vmatpush1.msra.mxu0 %v281
      %330 = vmatprep.subr.mxu0 0.0
      %331 = vmatpush1.msra.mxu0 %v280
      %332 = vmatprep.subr.mxu0 0.0
      %333 = vmatpush1.msra.mxu0 %v279
      %334 = vmatprep.subr.mxu0 0.0
      %335 = vmatpush2.msra.mxu0 0.0
      %336 = vmatprep.subr.mxu0 0.0
      %337 = vmatpush2.msra.mxu0 0.0
      %338 = vmatprep.subr.mxu0 0.0
      %339 = vmatpush2.msra.mxu0 0.0
      %340 = vmatprep.subr.mxu0 0.0
      %341 = vmatpush2.msra.mxu0 0.0
      %342 = vmatprep.subr.mxu0 0.0
      %343 = vmatpush2.msra.mxu0 0.0
      %344 = vmatprep.subr.mxu0 0.0
      %345 = vmatpush2.msra.mxu0 0.0
      %346 = vmatprep.subr.mxu0 0.0
      %347 = vmatpush2.msra.mxu0 0.0
      %348 = vmatprep.subr.mxu0 0.0
      %349 = vmatpush2.msra.mxu0 0.0
      %350 = vmatprep.subr.mxu0 0.0
      %351 = vmatpush2.msra.mxu0 0.0
      %352 = vmatprep.subr.mxu0 0.0
      %353 = vmatpush2.msra.mxu0 0.0
      %354 = vmatprep.subr.mxu0 0.0
      %355 = vmatpush2.msra.mxu0 0.0
      %356 = vmatprep.subr.mxu0 0.0
      %357 = vmatpush2.msra.mxu0 0.0
      %358 = vmatprep.subr.mxu0 0.0
      %359 = vmatpush2.msra.mxu0 0.0
      %360 = vmatprep.subr.mxu0 0.0
      %361 = vmatpush2.msra.mxu0 0.0
      %362 = vmatprep.subr.mxu0 0.0
      %363 = vmatpush2.msra.mxu0 0.0
      %364 = vmatprep.subr.mxu0 0.0
      %365 = vmatpush2.msra.mxu0 0.0
      %366 = vmatprep.mubr.f32.mxu0 0.0
      %367 = vmatmul.mubr.f32.gmra.mxu0 %v277
      %v368 = vpop.f32.mrf.mxu0
      %v369 = vadd.f32 %v300, %v368
      %v370 = vpop.f32.mrf.mxu0
      %371 = vmatprep.mubr.f32.mxu0 0.0
      %372 = vmatmul.mubr.f32.gmra.mxu0 %v278
      %v373 = vpop.f32.mrf.mxu0
      %v374 = vadd.f32 %v300, %v373
      %v375 = vpop.f32.mrf.mxu0
      %376 = vdwg.mxu0
      %v377 = vmax.f32 %v369, 0.0
      %v378 = vmax.f32 %v374, 0.0
      %v379 = vld [vmem:[%s4] sm:$0xff]
      %v380 = vld [vmem:[%s4 + $0x8] sm:$0xff]
      %v381 = vld [vmem:[%s4 + $0x10] sm:$0xff]
      %v382 = vld [vmem:[%s4 + $0x18] sm:$0xff]
      %v383 = vld [vmem:[%s4 + $0x20] sm:$0xff]
      %v384 = vld [vmem:[%s4 + $0x28] sm:$0xff]
      %v385 = vld [vmem:[%s4 + $0x30] sm:$0xff]
      %v386 = vld [vmem:[%s4 + $0x38] sm:$0xff]
      %vm387 = vcmask 523264
      %v389 = vsel %vm387, %v377, 0
      %v392 = vsel %vm387, %v378, 0
      %394 = vmatprep.subr.mxu0 0.0
      %395 = vmatpush1.msra.mxu0 0.0
      %396 = vmatprep.subr.mxu0 0.0
      %397 = vmatpush1.msra.mxu0 0.0
      %398 = vmatprep.subr.mxu0 0.0
      %399 = vmatpush1.msra.mxu0 0.0
      %400 = vmatprep.subr.mxu0 0.0
      %401 = vmatpush1.msra.mxu0 0.0
      %402 = vmatprep.subr.mxu0 0.0
      %403 = vmatpush1.msra.mxu0 0.0
      %404 = vmatprep.subr.mxu0 0.0
      %405 = vmatpush1.msra.mxu0 0.0
      %406 = vmatprep.subr.mxu0 0.0
      %407 = vmatpush1.msra.mxu0 0.0
      %408 = vmatprep.subr.mxu0 0.0
      %409 = vmatpush1.msra.mxu0 0.0
      %410 = vmatprep.subr.mxu0 0.0
      %411 = vmatpush1.msra.mxu0 %v386
      %412 = vmatprep.subr.mxu0 0.0
      %413 = vmatpush1.msra.mxu0 %v385
      %414 = vmatprep.subr.mxu0 0.0
      %415 = vmatpush1.msra.mxu0 %v384
      %416 = vmatprep.subr.mxu0 0.0
      %417 = vmatpush1.msra.mxu0 %v383
      %418 = vmatprep.subr.mxu0 0.0
      %419 = vmatpush1.msra.mxu0 %v382
      %420 = vmatprep.subr.mxu0 0.0
      %421 = vmatpush1.msra.mxu0 %v381
      %422 = vmatprep.subr.mxu0 0.0
      %423 = vmatpush1.msra.mxu0 %v380
      %424 = vmatprep.subr.mxu0 0.0
      %425 = vmatpush1.msra.mxu0 %v379
      %426 = vmatprep.subr.mxu0 0.0
      %427 = vmatpush2.msra.mxu0 0.0
      %428 = vmatprep.subr.mxu0 0.0
      %429 = vmatpush2.msra.mxu0 0.0
      %430 = vmatprep.subr.mxu0 0.0
      %431 = vmatpush2.msra.mxu0 0.0
      %432 = vmatprep.subr.mxu0 0.0
      %433 = vmatpush2.msra.mxu0 0.0
      %434 = vmatprep.subr.mxu0 0.0
      %435 = vmatpush2.msra.mxu0 0.0
      %436 = vmatprep.subr.mxu0 0.0
      %437 = vmatpush2.msra.mxu0 0.0
      %438 = vmatprep.subr.mxu0 0.0
      %439 = vmatpush2.msra.mxu0 0.0
      %440 = vmatprep.subr.mxu0 0.0
      %441 = vmatpush2.msra.mxu0 0.0
      %442 = vmatprep.subr.mxu0 0.0
      %443 = vmatpush2.msra.mxu0 0.0
      %444 = vmatprep.subr.mxu0 0.0
      %445 = vmatpush2.msra.mxu0 0.0
      %446 = vmatprep.subr.mxu0 0.0
      %447 = vmatpush2.msra.mxu0 0.0
      %448 = vmatprep.subr.mxu0 0.0
      %449 = vmatpush2.msra.mxu0 0.0
      %450 = vmatprep.subr.mxu0 0.0
      %451 = vmatpush2.msra.mxu0 0.0
      %452 = vmatprep.subr.mxu0 0.0
      %453 = vmatpush2.msra.mxu0 0.0
      %454 = vmatprep.subr.mxu0 0.0
      %455 = vmatpush2.msra.mxu0 0.0
      %456 = vmatprep.subr.mxu0 0.0
      %457 = vmatpush2.msra.mxu0 0.0
      %458 = vmatprep.mubr.f32.mxu0 0.0
      %459 = vmatmul.mubr.f32.gmra.mxu0 %v389
      %v460 = vpop.f32.mrf.mxu0
      %v461 = vadd.f32 0.0, %v460
      %v462 = vpop.f32.mrf.mxu0
      %463 = vmatprep.mubr.f32.mxu0 0.0
      %464 = vmatmul.mubr.f32.gmra.mxu0 %v392
      %v465 = vpop.f32.mrf.mxu0
      %v466 = vadd.f32 0.0, %v465
      %v467 = vpop.f32.mrf.mxu0
      %468 = vdwg.mxu0
      %v469 = vld [vmem:[%s5] sm:$0xff]
      %v470 = vld [vmem:[%s5 + $0x8] sm:$0xff]
      %vm471 = vcmask 64512
      %v473 = vsel %vm471, %v469, 0
      %v476 = vsel %vm471, %v470, 0
      %478 = vmatprep.subr.mxu0 0.0
      %479 = vmatpush1.msra.mxu0 0.0
      %480 = vmatprep.subr.mxu0 0.0
      %481 = vmatpush1.msra.mxu0 0.0
      %482 = vmatprep.subr.mxu0 0.0
      %483 = vmatpush1.msra.mxu0 0.0
      %484 = vmatprep.subr.mxu0 0.0
      %485 = vmatpush1.msra.mxu0 0.0
      %486 = vmatprep.subr.mxu0 0.0
      %487 = vmatpush1.msra.mxu0 0.0
      %488 = vmatprep.subr.mxu0 0.0
      %489 = vmatpush1.msra.mxu0 0.0
      %490 = vmatprep.subr.mxu0 0.0
      %491 = vmatpush1.msra.mxu0 0.0
      %492 = vmatprep.subr.mxu0 0.0
      %493 = vmatpush1.msra.mxu0 0.0
      %494 = vmatprep.subr.mxu0 0.0
      %495 = vmatpush1.msra.mxu0 0.0
      %496 = vmatprep.subr.mxu0 0.0
      %497 = vmatpush1.msra.mxu0 0.0
      %498 = vmatprep.subr.mxu0 0.0
      %499 = vmatpush1.msra.mxu0 0.0
      %500 = vmatprep.subr.mxu0 0.0
      %501 = vmatpush1.msra.mxu0 0.0
      %502 = vmatprep.subr.mxu0 0.0
      %503 = vmatpush1.msra.mxu0 0.0
      %504 = vmatprep.subr.mxu0 0.0
      %505 = vmatpush1.msra.mxu0 0.0
      %506 = vmatprep.subr.mxu0 0.0
      %507 = vmatpush1.msra.mxu0 0.0
      %508 = vmatprep.subr.mxu0 0.0
      %509 = vmatpush1.msra.mxu0 %v461
      %510 = vmatprep.subr.mxu0 0.0
      %511 = vmatpush2.msra.mxu0 0.0
      %512 = vmatprep.subr.mxu0 0.0
      %513 = vmatpush2.msra.mxu0 0.0
      %514 = vmatprep.subr.mxu0 0.0
      %515 = vmatpush2.msra.mxu0 0.0
      %516 = vmatprep.subr.mxu0 0.0
      %517 = vmatpush2.msra.mxu0 0.0
      %518 = vmatprep.subr.mxu0 0.0
      %519 = vmatpush2.msra.mxu0 0.0
      %520 = vmatprep.subr.mxu0 0.0
      %521 = vmatpush2.msra.mxu0 0.0
      %522 = vmatprep.subr.mxu0 0.0
      %523 = vmatpush2.msra.mxu0 0.0
      %524 = vmatprep.subr.mxu0 0.0
      %525 = vmatpush2.msra.mxu0 0.0
      %526 = vmatprep.subr.mxu0 0.0
      %527 = vmatpush2.msra.mxu0 0.0
      %528 = vmatprep.subr.mxu0 0.0
      %529 = vmatpush2.msra.mxu0 0.0
      %530 = vmatprep.subr.mxu0 0.0
      %531 = vmatpush2.msra.mxu0 0.0
      %532 = vmatprep.subr.mxu0 0.0
      %533 = vmatpush2.msra.mxu0 0.0
      %534 = vmatprep.subr.mxu0 0.0
      %535 = vmatpush2.msra.mxu0 0.0
      %536 = vmatprep.subr.mxu0 0.0
      %537 = vmatpush2.msra.mxu0 0.0
      %538 = vmatprep.subr.mxu0 0.0
      %539 = vmatpush2.msra.mxu0 0.0
      %540 = vmatprep.subr.mxu0 0.0
      %541 = vmatpush2.msra.mxu0 0.0
      %542 = vmatprep.mubr.f32.mxu0 0.0
      %543 = vmatmul.mubr.f32.gmra.mxu0 %v473
      %v544 = vpop.f32.mrf.mxu0
      %v545 = vadd.f32 0.0, %v544
      %v546 = vpop.f32.mrf.mxu0
      %547 = vmatprep.mubr.f32.mxu0 0.0
      %548 = vmatmul.mubr.f32.gmra.mxu0 %v476
      %v549 = vpop.f32.mrf.mxu0
      %v550 = vadd.f32 0.0, %v549
      %v551 = vpop.f32.mrf.mxu0
      %552 = vdwg.mxu0
      %553 = vmatprep.subr.mxu0 0.0
      %554 = vmatpush1.msra.mxu0 0.0
      %555 = vmatprep.subr.mxu0 0.0
      %556 = vmatpush1.msra.mxu0 0.0
      %557 = vmatprep.subr.mxu0 0.0
      %558 = vmatpush1.msra.mxu0 0.0
      %559 = vmatprep.subr.mxu0 0.0
      %560 = vmatpush1.msra.mxu0 0.0
      %561 = vmatprep.subr.mxu0 0.0
      %562 = vmatpush1.msra.mxu0 0.0
      %563 = vmatprep.subr.mxu0 0.0
      %564 = vmatpush1.msra.mxu0 0.0
      %565 = vmatprep.subr.mxu0 0.0
      %566 = vmatpush1.msra.mxu0 0.0
      %567 = vmatprep.subr.mxu0 0.0
      %568 = vmatpush1.msra.mxu0 0.0
      %569 = vmatprep.subr.mxu0 0.0
      %570 = vmatpush1.msra.mxu0 0.0
      %571 = vmatprep.subr.mxu0 0.0
      %572 = vmatpush1.msra.mxu0 0.0
      %573 = vmatprep.subr.mxu0 0.0
      %574 = vmatpush1.msra.mxu0 0.0
      %575 = vmatprep.subr.mxu0 0.0
      %576 = vmatpush1.msra.mxu0 0.0
      %577 = vmatprep.subr.mxu0 0.0
      %578 = vmatpush1.msra.mxu0 0.0
      %579 = vmatprep.subr.mxu0 0.0
      %580 = vmatpush1.msra.mxu0 0.0
      %581 = vmatprep.subr.mxu0 0.0
      %582 = vmatpush1.msra.mxu0 0.0
      %583 = vmatprep.subr.mxu0 0.0
      %584 = vmatpush1.msra.mxu0 %v466
      %585 = vmatprep.subr.mxu0 0.0
      %586 = vmatpush2.msra.mxu0 0.0
      %587 = vmatprep.subr.mxu0 0.0
      %588 = vmatpush2.msra.mxu0 0.0
      %589 = vmatprep.subr.mxu0 0.0
      %590 = vmatpush2.msra.mxu0 0.0
      %591 = vmatprep.subr.mxu0 0.0
      %592 = vmatpush2.msra.mxu0 0.0
      %593 = vmatprep.subr.mxu0 0.0
      %594 = vmatpush2.msra.mxu0 0.0
      %595 = vmatprep.subr.mxu0 0.0
      %596 = vmatpush2.msra.mxu0 0.0
      %597 = vmatprep.subr.mxu0 0.0
      %598 = vmatpush2.msra.mxu0 0.0
      %599 = vmatprep.subr.mxu0 0.0
      %600 = vmatpush2.msra.mxu0 0.0
      %601 = vmatprep.subr.mxu0 0.0
      %602 = vmatpush2.msra.mxu0 0.0
      %603 = vmatprep.subr.mxu0 0.0
      %604 = vmatpush2.msra.mxu0 0.0
      %605 = vmatprep.subr.mxu0 0.0
      %606 = vmatpush2.msra.mxu0 0.0
      %607 = vmatprep.subr.mxu0 0.0
      %608 = vmatpush2.msra.mxu0 0.0
      %609 = vmatprep.subr.mxu0 0.0
      %610 = vmatpush2.msra.mxu0 0.0
      %611 = vmatprep.subr.mxu0 0.0
      %612 = vmatpush2.msra.mxu0 0.0
      %613 = vmatprep.subr.mxu0 0.0
      %614 = vmatpush2.msra.mxu0 0.0
      %615 = vmatprep.subr.mxu0 0.0
      %616 = vmatpush2.msra.mxu0 0.0
      %617 = vmatprep.mubr.f32.mxu0 0.0
      %618 = vmatmul.mubr.f32.gmra.mxu0 %v473
      %v619 = vpop.f32.mrf.mxu0
      %v620 = vadd.f32 0.0, %v619
      %v621 = vpop.f32.mrf.mxu0
      %622 = vmatprep.mubr.f32.mxu0 0.0
      %623 = vmatmul.mubr.f32.gmra.mxu0 %v476
      %v624 = vpop.f32.mrf.mxu0
      %v625 = vadd.f32 0.0, %v624
      %v626 = vpop.f32.mrf.mxu0
      %627 = vdwg.mxu0
      %v628 = vld [vmem:[%s269] sm:$0xff]
      %v629 = vld [vmem:[%s269 + $0x8] sm:$0xff]
      %v630 = vld [vmem:[%s269 + $0x10] sm:$0xff]
      %v631 = vld [vmem:[%s269 + $0x18] sm:$0xff]
      %v632 = vadd.f32 %v545, %v628
      %v633 = vadd.f32 %v550, %v629
      %v634 = vadd.f32 %v620, %v630
      %v635 = vadd.f32 %v625, %v631
      %v636 = vmax.f32 %v632, 0.0
      %v637 = vmax.f32 %v633, 0.0
      %v638 = vmax.f32 %v634, 0.0
      %v639 = vmax.f32 %v635, 0.0
      %640 = vst [vmem:[%s275] sm:$0xff] %v636
      %641 = vst [vmem:[%s275 + $0x8] sm:$0xff] %v637
      %642 = vst [vmem:[%s275 + $0x10] sm:$0xff] %v638
      %643 = vst [vmem:[%s275 + $0x18] sm:$0xff] %v639
      %s644 = smul.u32 4, %s17
      %p645 = scmp.lt.s32.totalorder %s644, 7
      %s646 = scalar_select %p645, %s644, 7
      %s647 = smul.addr %s646, 8
      %s648 = scalar_lea.vmem %s6, %s647
      // Predicated region
      $region45: #{upsample_block.1} parent=43 // pred_check
        %p649 = pneg %p171
      $region46: #{upsample_block.1} parent=43 // pred_check_branch
        %651 = sbr.rel (%p649) target = $region48
      $region47: #{upsample_block.1} parent=43 // pred_region
        %s652 = smul.u32 4, %s17
      $region48: #{upsample_block.1} parent=43 // pred_fallthru
        _
    $region44: #{upsample_block.1} parent=5 // pred_fallthru
      _
    %p653 = scmp.le.s32.totalorder 2, %s12
    // Predicated region
    $region49: #{upsample_block.1} parent=5 // pred_check
      %p654 = pneg %p653
    $region50: #{upsample_block.1} parent=5 // pred_check_branch
      %656 = sbr.rel (%p654) target = $region52
    $region51: #{upsample_block.1} parent=5 // pred_region
      %s657 = ssub.s32 %s12, 2
      // Predicated region
      $region53: #{upsample_block.1} parent=51 // pred_check
        %p658 = pneg %p177
      $region54: #{upsample_block.1} parent=51 // pred_check_branch
        %660 = sbr.rel (%p658) target = $region56
      $region55: #{upsample_block.1} parent=51 // pred_region
        %s661 = smul.u32 4, %s18
        %p662 = scmp.lt.s32.totalorder %s661, 7
        %s663 = scalar_select %p662, %s661, 7
        %s664 = smul.addr %s663, 8
        %s665 = scalar_lea.vmem %s6, %s664
      $region56: #{upsample_block.1} parent=51 // pred_fallthru
        _
    $region52: #{upsample_block.1} parent=5 // pred_fallthru
      _
  $region6: #{upsample_block.1} parent=0 // loop_footer
    %s16 = sadd.s32 1, %s12
  $region7: #{upsample_block.1} parent=0 // loop_footer_branch
    %11 = sbr.rel target = $region3
  $region8: #{upsample_block.1} parent=0 // loop_exit
    _

</llo_original>
